<compile_context>
chip_gen: v6e
topology: v6e:2x2x1
jax: 0.10.0
libtpu: 0.0.40
codegen_flags: <defaults>
</compile_context>

<pallas_src>
import jax
import jax.numpy as jnp
from jax.experimental import pallas as pl
from jax.experimental.pallas import tpu as pltpu

GUMBEL_BETA = 0.01
INV_GUMBEL_BETA = 1.0 / GUMBEL_BETA
EULER_GAMMA = 0.5772156649015329
SHIFT = 2.0 * EULER_GAMMA * GUMBEL_BETA            # 2*gamma*beta
F32_TINY = float(jnp.finfo(jnp.float32).tiny)      # torch.finfo(float32).tiny


def _softplus(x):
    # Matches F.softplus(x, beta=1.0) including its threshold=20 fast path.
    return jnp.where(x > 20.0, x, jnp.log1p(jnp.exp(jnp.minimum(x, 20.0))))


def hge_kernel(umin_ref, udlt_ref, imin_ref, idlt_ref, out_ref):
    # All input refs: (TB, d2) lane-aligned VMEM tiles; out_ref: (TB, 1).
    u_min = umin_ref[...]
    i_min = imin_ref[...]
    u_ext = jnp.exp(udlt_ref[...])        # u_max - u_min
    i_ext = jnp.exp(idlt_ref[...])        # i_max - i_min  (reused for log_item)
    u_max = u_min + u_ext
    i_max = i_min + i_ext

    # gb * logsumexp([a/gb, b/gb], 0) == max(a,b) + gb*log1p(exp(-|a-b|/gb))
    # which is >= max(a,b) exactly, so the original clamp is redundant.
    int_min = jnp.maximum(u_min, i_min) + GUMBEL_BETA * jnp.log1p(
        jnp.exp(-jnp.abs(u_min - i_min) * INV_GUMBEL_BETA))

    # -gb * logsumexp([-a/gb, -b/gb], 0) == min(a,b) - gb*log1p(exp(-|a-b|/gb))
    int_max = jnp.minimum(u_max, i_max) - GUMBEL_BETA * jnp.log1p(
        jnp.exp(-jnp.abs(u_max - i_max) * INV_GUMBEL_BETA))

    log_int = jnp.sum(
        jnp.log(jnp.maximum(_softplus((int_max - int_min) - SHIFT), F32_TINY)),
        axis=-1, keepdims=True)
    log_item = jnp.sum(
        jnp.log(jnp.maximum(_softplus(i_ext - SHIFT), F32_TINY)),
        axis=-1, keepdims=True)

    out_ref[...] = log_int / log_item


def _pick_block_rows(batch, d2, *, max_rows=512, vmem_budget_bytes=8 * 1024 * 1024):
    """Pick a batch tile: multiple of 8, <= max_rows, double-buffered inputs fit budget."""
    # 4 input halves * 2 pipeline buffers * TB * d2 * 4 bytes <= budget
    tb = vmem_budget_bytes // (4 * 2 * max(d2, 1) * 4)
    tb = max(8, min(max_rows, tb))
    tb -= tb % 8
    if batch <= tb:
        tb = max(8, ((batch + 7) // 8) * 8)   # single tile, rounded up to sublane multiple
    return tb


def hge_forward(user_embeddings, item_embeddings, *, max_block_rows=512):
    B, dim = user_embeddings.shape
    d2 = dim // 2

    # Split min/delta halves in the wrapper so the kernel reads whole,
    # lane-aligned tiles (no mid-lane slice at d2 inside the kernel).
    u_min = user_embeddings[:, :d2]
    u_dlt = user_embeddings[:, d2:]
    i_min = item_embeddings[:, :d2]
    i_dlt = item_embeddings[:, d2:]

    TB = _pick_block_rows(B, d2, max_rows=max_block_rows)
    n_tiles = pl.cdiv(B, TB)
    B_pad = n_tiles * TB
    if B_pad != B:
        pad = ((0, B_pad - B), (0, 0))
        u_min = jnp.pad(u_min, pad)
        u_dlt = jnp.pad(u_dlt, pad)
        i_min = jnp.pad(i_min, pad)
        i_dlt = jnp.pad(i_dlt, pad)

    half_spec = pl.BlockSpec((TB, d2), lambda i: (i, 0))
    out_spec = pl.BlockSpec((TB, 1), lambda i: (i, 0))

    # ~10 VPU flops and ~6 transcendentals per original embedding element;
    # reads 2*B*dim f32, writes B f32.
    cost = pl.CostEstimate(
        flops=10 * B_pad * dim,
        transcendentals=6 * B_pad * dim,
        bytes_accessed=2 * B_pad * dim * 4 + B_pad * 4,
    )

    pos = pl.pallas_call(
        hge_kernel,
        out_shape=jax.ShapeDtypeStruct((B_pad, 1), jnp.float32),
        grid=(n_tiles,),
        in_specs=[half_spec, half_spec, half_spec, half_spec],
        out_specs=out_spec,
        compiler_params=pltpu.CompilerParams(
            dimension_semantics=("parallel",)),
        cost_estimate=cost,
    )(u_min, u_dlt, i_min, i_dlt)

    # Match the PyTorch return signature.
    return pos[:B, 0], user_embeddings, item_embeddings


def hge_reference(user_embeddings, item_embeddings):
    """Pure-JAX reference of the PyTorch forward (for correctness check)."""
    dim = user_embeddings.shape[1]
    d2 = dim // 2
    gb = GUMBEL_BETA

    def get_hyperr(e):
        mn = e[:, :d2]
        mx = mn + jnp.exp(e[:, d2:])
        return mn, mx

    u_min, u_max = get_hyperr(user_embeddings)
    i_min, i_max = get_hyperr(item_embeddings)

    int_min = gb * jax.scipy.special.logsumexp(
        jnp.stack((u_min / gb, i_min / gb)), axis=0)
    int_min = jnp.maximum(int_min, jnp.maximum(u_min, i_min))
    int_max = -gb * jax.scipy.special.logsumexp(
        jnp.stack((-u_max / gb, -i_max / gb)), axis=0)
    int_max = jnp.minimum(int_max, jnp.minimum(u_max, i_max))

    def log_vol(mn, mx):
        return jnp.sum(
            jnp.log(jnp.maximum(jax.nn.softplus((mx - mn) - SHIFT), F32_TINY)),
            axis=-1)

    return log_vol(int_min, int_max) / log_vol(i_min, i_max)


if __name__ == "__main__":
    key = jax.random.PRNGKey(0)

    # Case 1: batch divisible by the sublane multiple.
    B, dim = 8, 64
    ku, ki, key = jax.random.split(key, 3)
    user_embeddings = jax.random.normal(ku, (B, dim), dtype=jnp.float32)
    item_embeddings = jax.random.normal(ki, (B, dim), dtype=jnp.float32)
    pos, _, _ = hge_forward(user_embeddings, item_embeddings)
    pos = jax.block_until_ready(pos)
    ref = jax.block_until_ready(hge_reference(user_embeddings, item_embeddings))
    assert pos.shape == (B,)
    assert jnp.allclose(pos, ref, rtol=1e-5, atol=1e-5), (pos, ref)

    # Case 2: ragged batch (exercises the pad + slice-back path).
    B2 = 13
    ku2, ki2 = jax.random.split(key)
    user2 = jax.random.normal(ku2, (B2, dim), dtype=jnp.float32)
    item2 = jax.random.normal(ki2, (B2, dim), dtype=jnp.float32)
    pos2, _, _ = hge_forward(user2, item2)
    pos2 = jax.block_until_ready(pos2)
    ref2 = jax.block_until_ready(hge_reference(user2, item2))
    assert pos2.shape == (B2,)
    assert jnp.allclose(pos2, ref2, rtol=1e-5, atol=1e-5), (pos2, ref2)

    print("KERNEL_OK")
</pallas_src>

<mosaic_0001>
module attributes {stable_mosaic.version = 11 : i64} {
  func.func @hge_kernel(%arg0: i32, %arg1: memref<8x32xf32, #tpu.memory_space<vmem>>, %arg2: memref<8x32xf32, #tpu.memory_space<vmem>>, %arg3: memref<8x32xf32, #tpu.memory_space<vmem>>, %arg4: memref<8x32xf32, #tpu.memory_space<vmem>>, %arg5: memref<8x1xf32, #tpu.memory_space<vmem>>) attributes {dimension_semantics = [#tpu.dimension_semantics<parallel>], iteration_bounds = array<i64: 1>, scalar_prefetch = 0 : i64, scratch_operands = 0 : i64, tpu.core_type = #tpu.core_type<tc>, window_params = [{transform_indices = @transform_0, window_bounds = array<i64: 8, 32>}, {transform_indices = @transform_1, window_bounds = array<i64: 8, 32>}, {transform_indices = @transform_2, window_bounds = array<i64: 8, 32>}, {transform_indices = @transform_3, window_bounds = array<i64: 8, 32>}, {transform_indices = @transform_4, window_bounds = array<i64: 8, 1>}]} {
    %c0 = arith.constant 0 : index
    %c0_0 = arith.constant 0 : index
    %0 = vector.load %arg1[%c0, %c0_0] : memref<8x32xf32, #tpu.memory_space<vmem>>, vector<8x32xf32>
    %c0_1 = arith.constant 0 : index
    %c0_2 = arith.constant 0 : index
    %1 = vector.load %arg3[%c0_1, %c0_2] : memref<8x32xf32, #tpu.memory_space<vmem>>, vector<8x32xf32>
    %c0_3 = arith.constant 0 : index
    %c0_4 = arith.constant 0 : index
    %2 = vector.load %arg2[%c0_3, %c0_4] : memref<8x32xf32, #tpu.memory_space<vmem>>, vector<8x32xf32>
    %3 = math.exp %2 : vector<8x32xf32>
    %c0_5 = arith.constant 0 : index
    %c0_6 = arith.constant 0 : index
    %4 = vector.load %arg4[%c0_5, %c0_6] : memref<8x32xf32, #tpu.memory_space<vmem>>, vector<8x32xf32>
    %5 = math.exp %4 : vector<8x32xf32>
    %6 = arith.addf %0, %3 : vector<8x32xf32>
    %7 = arith.addf %1, %5 : vector<8x32xf32>
    %8 = arith.maximumf %0, %1 : vector<8x32xf32>
    %9 = arith.subf %0, %1 : vector<8x32xf32>
    %10 = math.absf %9 : vector<8x32xf32>
    %cst = arith.constant 0.000000e+00 : f32
    %11 = vector.broadcast %cst : f32 to vector<8x32xf32>
    %12 = arith.subf %11, %10 : vector<8x32xf32>
    %cst_7 = arith.constant 1.000000e+02 : f32
    %13 = vector.broadcast %cst_7 : f32 to vector<8x32xf32>
    %14 = arith.mulf %12, %13 : vector<8x32xf32>
    %15 = math.exp %14 : vector<8x32xf32>
    %16 = math.log1p %15 : vector<8x32xf32>
    %cst_8 = arith.constant 0.00999999977 : f32
    %17 = vector.broadcast %cst_8 : f32 to vector<8x32xf32>
    %18 = arith.mulf %17, %16 : vector<8x32xf32>
    %19 = arith.addf %8, %18 : vector<8x32xf32>
    %20 = arith.minimumf %6, %7 : vector<8x32xf32>
    %21 = arith.subf %6, %7 : vector<8x32xf32>
    %22 = math.absf %21 : vector<8x32xf32>
    %cst_9 = arith.constant 0.000000e+00 : f32
    %23 = vector.broadcast %cst_9 : f32 to vector<8x32xf32>
    %24 = arith.subf %23, %22 : vector<8x32xf32>
    %cst_10 = arith.constant 1.000000e+02 : f32
    %25 = vector.broadcast %cst_10 : f32 to vector<8x32xf32>
    %26 = arith.mulf %24, %25 : vector<8x32xf32>
    %27 = math.exp %26 : vector<8x32xf32>
    %28 = math.log1p %27 : vector<8x32xf32>
    %cst_11 = arith.constant 0.00999999977 : f32
    %29 = vector.broadcast %cst_11 : f32 to vector<8x32xf32>
    %30 = arith.mulf %29, %28 : vector<8x32xf32>
    %31 = arith.subf %20, %30 : vector<8x32xf32>
    %32 = arith.subf %31, %19 : vector<8x32xf32>
    %cst_12 = arith.constant 0.0115443133 : f32
    %33 = vector.broadcast %cst_12 : f32 to vector<8x32xf32>
    %34 = arith.subf %32, %33 : vector<8x32xf32>
    %cst_13 = arith.constant 2.000000e+01 : f32
    %35 = vector.broadcast %cst_13 : f32 to vector<8x32xf32>
    %36 = arith.cmpf ogt, %34, %35 : vector<8x32xf32>
    %cst_14 = arith.constant 2.000000e+01 : f32
    %37 = vector.broadcast %cst_14 : f32 to vector<8x32xf32>
    %38 = arith.minimumf %34, %37 : vector<8x32xf32>
    %39 = math.exp %38 : vector<8x32xf32>
    %40 = math.log1p %39 : vector<8x32xf32>
    %41 = arith.select %36, %34, %40 : vector<8x32xi1>, vector<8x32xf32>
    %cst_15 = arith.constant 1.17549435E-38 : f32
    %42 = vector.broadcast %cst_15 : f32 to vector<8x32xf32>
    %43 = arith.maximumf %41, %42 : vector<8x32xf32>
    %44 = math.log %43 : vector<8x32xf32>
    %cst_16 = arith.constant dense<0.000000e+00> : vector<8xf32>
    %45 = vector.multi_reduction <add>, %44, %cst_16 [1] : vector<8x32xf32> to vector<8xf32>
    %46 = vector.shape_cast %45 : vector<8xf32> to vector<8x1xf32>
    %cst_17 = arith.constant 0.0115443133 : f32
    %47 = vector.broadcast %cst_17 : f32 to vector<8x32xf32>
    %48 = arith.subf %5, %47 : vector<8x32xf32>
    %cst_18 = arith.constant 2.000000e+01 : f32
    %49 = vector.broadcast %cst_18 : f32 to vector<8x32xf32>
    %50 = arith.cmpf ogt, %48, %49 : vector<8x32xf32>
    %cst_19 = arith.constant 2.000000e+01 : f32
    %51 = vector.broadcast %cst_19 : f32 to vector<8x32xf32>
    %52 = arith.minimumf %48, %51 : vector<8x32xf32>
    %53 = math.exp %52 : vector<8x32xf32>
    %54 = math.log1p %53 : vector<8x32xf32>
    %55 = arith.select %50, %48, %54 : vector<8x32xi1>, vector<8x32xf32>
    %cst_20 = arith.constant 1.17549435E-38 : f32
    %56 = vector.broadcast %cst_20 : f32 to vector<8x32xf32>
    %57 = arith.maximumf %55, %56 : vector<8x32xf32>
    %58 = math.log %57 : vector<8x32xf32>
    %cst_21 = arith.constant dense<0.000000e+00> : vector<8xf32>
    %59 = vector.multi_reduction <add>, %58, %cst_21 [1] : vector<8x32xf32> to vector<8xf32>
    %60 = vector.shape_cast %59 : vector<8xf32> to vector<8x1xf32>
    %61 = arith.divf %46, %60 : vector<8x1xf32>
    %c0_22 = arith.constant 0 : index
    %c0_23 = arith.constant 0 : index
    %62 = vector.load %arg5[%c0_22, %c0_23] : memref<8x1xf32, #tpu.memory_space<vmem>>, vector<8x1xf32>
    tpu.vector_store %arg5[%c0_22, %c0_23], %61 {strides = array<i32>} : memref<8x1xf32, #tpu.memory_space<vmem>>, vector<8x1xf32>,
    return
  }
  func.func @transform_0(%arg0: i32) -> (i32, i32) {
    %c0_i32 = arith.constant 0 : i32
    %c0_i32_0 = arith.constant 0 : i32
    return %arg0, %c0_i32 : i32, i32
  }
  func.func @transform_1(%arg0: i32) -> (i32, i32) {
    %c0_i32 = arith.constant 0 : i32
    %c0_i32_0 = arith.constant 0 : i32
    return %arg0, %c0_i32 : i32, i32
  }
  func.func @transform_2(%arg0: i32) -> (i32, i32) {
    %c0_i32 = arith.constant 0 : i32
    %c0_i32_0 = arith.constant 0 : i32
    return %arg0, %c0_i32 : i32, i32
  }
  func.func @transform_3(%arg0: i32) -> (i32, i32) {
    %c0_i32 = arith.constant 0 : i32
    %c0_i32_0 = arith.constant 0 : i32
    return %arg0, %c0_i32 : i32, i32
  }
  func.func @transform_4(%arg0: i32) -> (i32, i32) {
    %c0_i32 = arith.constant 0 : i32
    %c0_i32_0 = arith.constant 0 : i32
    return %arg0, %c0_i32 : i32, i32
  }
}

</mosaic_0001>

<llo_original>
// kernel: tpu_custom_call.1
$region0: #{tpu_custom_call.1}
  #allocation0 [shape = 'u32[]', space=smem, size = 0x4, offset = 0x4, fixed_abs, tag = 'smem constant byte address 0x4 - core index']
  #allocation1 [shape = 'u32[144,128]{1,0:T(1,128)}', space=vmem, size = 0x12000, scoped, tag = 'internal scratch']
  %s0 = inlined_call_operand.hbm [shape: f32[8,32], index: 0, kind: input, shape index: {}]
  %s1 = inlined_call_operand.hbm [shape: f32[8,32], index: 1, kind: input, shape index: {}]
  %s2 = inlined_call_operand.hbm [shape: f32[8,32], index: 2, kind: input, shape index: {}]
  %s3 = inlined_call_operand.hbm [shape: f32[8,32], index: 3, kind: input, shape index: {}]
  %s4 = inlined_call_operand.vmem [shape: f32[8,1], index: 4, kind: output, shape index: {}]
  %s5 = sld [smem:[#allocation0]]
  $region42: #{tpu_custom_call.1} parent=0
    _
  %s7 = ssub.s32 1, %s5
  %s8 = scalar_select 0, %s7, %s5
  $region1: #{tpu_custom_call.1} parent=0
    #allocation2 [shape = 'u8[4096]{0}', space=vmem, size = 0x1000, scoped, tag = 'input window, operand 0, single buffered']
    #allocation3 [shape = 's32[1]{0}', space=sflag, size = 0x4, scoped, tag = 'scoped memory for tpu_custom_call.1']
    #allocation4 [shape = 'u8[4096]{0}', space=vmem, size = 0x1000, scoped, tag = 'input window, operand 1, single buffered']
    #allocation5 [shape = 's32[1]{0}', space=sflag, size = 0x4, scoped, tag = 'scoped memory for tpu_custom_call.1']
    #allocation6 [shape = 'u8[4096]{0}', space=vmem, size = 0x1000, scoped, tag = 'input window, operand 2, single buffered']
    #allocation7 [shape = 'u8[4096]{0}', space=vmem, size = 0x1000, scoped, tag = 'input window, operand 3, single buffered']
    #allocation8 [shape = 's32[1]{0}', space=sflag, size = 0x4, scoped, tag = 'scoped memory for tpu_custom_call.1']
    %9 = vsyncpa [#allocation3], 0
    %10 = vsyncpa [#allocation5], 0
    %11 = vsyncpa [#allocation8], 0
    // Predicated region
    $region2: #{tpu_custom_call.1} parent=1 // pred_check
      _
    $region3: #{tpu_custom_call.1} parent=1 // pred_check_branch
      %13 = sbr.rel (0) target = $region5
    $region4: #{tpu_custom_call.1} parent=1 // pred_region
      %s15 = ssub.s32 128, 128
      %16 = vsyncadd [#allocation3], %s15
      %s18 = sshll.u32 [#allocation2], 4
      %s19 = int_to_ptr.vmem [resolvable:$true] %s18
      %21 = dma.hbm_to_vmem [thread:$0]  %s0, 128, %s19, [#allocation3]
    $region5: #{tpu_custom_call.1} parent=1 // pred_fallthru
      _
    // Predicated region
    $region6: #{tpu_custom_call.1} parent=1 // pred_check
      _
    $region7: #{tpu_custom_call.1} parent=1 // pred_check_branch
      %23 = sbr.rel (0) target = $region9
    $region8: #{tpu_custom_call.1} parent=1 // pred_region
      %s25 = ssub.s32 128, 128
      %26 = vsyncadd [#allocation5], %s25
      %s28 = sshll.u32 [#allocation4], 4
      %s29 = int_to_ptr.vmem [resolvable:$true] %s28
      %31 = dma.hbm_to_vmem [thread:$0]  %s1, 128, %s29, [#allocation5]
    $region9: #{tpu_custom_call.1} parent=1 // pred_fallthru
      _
    // Predicated region
    $region10: #{tpu_custom_call.1} parent=1 // pred_check
      _
    $region11: #{tpu_custom_call.1} parent=1 // pred_check_branch
      %33 = sbr.rel (0) target = $region13
    $region12: #{tpu_custom_call.1} parent=1 // pred_region
      %s35 = ssub.s32 128, 128
      %36 = vsyncadd [#allocation5], %s35
      %s38 = sshll.u32 [#allocation6], 4
      %s39 = int_to_ptr.vmem [resolvable:$true] %s38
      %41 = dma.hbm_to_vmem [thread:$0]  %s2, 128, %s39, [#allocation5]
    $region13: #{tpu_custom_call.1} parent=1 // pred_fallthru
      _
    // Predicated region
    $region14: #{tpu_custom_call.1} parent=1 // pred_check
      _
    $region15: #{tpu_custom_call.1} parent=1 // pred_check_branch
      %43 = sbr.rel (0) target = $region17
    $region16: #{tpu_custom_call.1} parent=1 // pred_region
      %s45 = ssub.s32 128, 128
      %46 = vsyncadd [#allocation8], %s45
      %s48 = sshll.u32 [#allocation7], 4
      %s49 = int_to_ptr.vmem [resolvable:$true] %s48
      %51 = dma.hbm_to_vmem [thread:$0]  %s3, 128, %s49, [#allocation8]
    $region17: #{tpu_custom_call.1} parent=1 // pred_fallthru
      _
    // Predicated region
    $region18: #{tpu_custom_call.1} parent=1 // pred_check
      _
    $region19: #{tpu_custom_call.1} parent=1 // pred_check_branch
      %53 = sbr.rel (0) target = $region21
    $region20: #{tpu_custom_call.1} parent=1 // pred_region
      %54 = dma.done [#allocation3], 128
    $region21: #{tpu_custom_call.1} parent=1 // pred_fallthru
      _
    // Predicated region
    $region22: #{tpu_custom_call.1} parent=1 // pred_check
      _
    $region23: #{tpu_custom_call.1} parent=1 // pred_check_branch
      %56 = sbr.rel (0) target = $region25
    $region24: #{tpu_custom_call.1} parent=1 // pred_region
      %57 = dma.done [#allocation5], 128
    $region25: #{tpu_custom_call.1} parent=1 // pred_fallthru
      _
    // Predicated region
    $region26: #{tpu_custom_call.1} parent=1 // pred_check
      _
    $region27: #{tpu_custom_call.1} parent=1 // pred_check_branch
      %59 = sbr.rel (0) target = $region29
    $region28: #{tpu_custom_call.1} parent=1 // pred_region
      %60 = dma.done [#allocation5], 128
    $region29: #{tpu_custom_call.1} parent=1 // pred_fallthru
      _
    // Predicated region
    $region30: #{tpu_custom_call.1} parent=1 // pred_check
      _
    $region31: #{tpu_custom_call.1} parent=1 // pred_check_branch
      %62 = sbr.rel (0) target = $region33
    $region32: #{tpu_custom_call.1} parent=1 // pred_region
      %63 = dma.done [#allocation8], 128
    $region33: #{tpu_custom_call.1} parent=1 // pred_fallthru
      _
    %v64 = vld [vmem:[#allocation2] sm:$0xff]
    %v65 = vld [vmem:[#allocation6] sm:$0xff]
    %v66 = vld [vmem:[#allocation4] sm:$0xff]
    %v67 = vmul.f32 %v66, 1.442695
    %v68 = vpow.pop %v67
    %v69 = vld [vmem:[#allocation7] sm:$0xff]
    %v70 = vmul.f32 %v69, 1.442695
    %v71 = vpow.pop %v70
    %v72 = vadd.f32 %v64, %v68
    %v73 = vadd.f32 %v65, %v71
    %v74 = vmax.f32 %v64, %v65
    %v75 = vsub.f32 %v64, %v65
    %v76 = vand.u32 2147483647, %v75
    %v77 = vsub.f32 0.0, %v76
    %v78 = vmul.f32 %v77, 100.0
    %v79 = vmul.f32 %v78, 1.442695
    %v80 = vpow.pop %v79
    %v81 = vadd.f32 %v80, 1.0
    %v82 = vlog2.pop %v81
    %v83 = vmul.f32 %v82, 0.6931472
    %v84 = vmul.f32 -0.5, %v80
    %v85 = vadd.f32 %v84, 1.0
    %v86 = vmul.f32 %v85, %v80
    %v87 = vand.u32 2147483647, %v80
    %vm88 = vcmp.lt.f32.partialorder %v87, 0.0004427343
    %v89 = vsel %vm88, %v86, %v83
    %v90 = vmul.f32 %v89, 0.01
    %v91 = vadd.f32 %v74, %v90
    %v92 = vmin.f32 %v72, %v73
    %v93 = vsub.f32 %v72, %v73
    %v94 = vand.u32 2147483647, %v93
    %v95 = vsub.f32 0.0, %v94
    %v96 = vmul.f32 %v95, 100.0
    %v97 = vmul.f32 %v96, 1.442695
    %v98 = vpow.pop %v97
    %v99 = vadd.f32 %v98, 1.0
    %v100 = vlog2.pop %v99
    %v101 = vmul.f32 %v100, 0.6931472
    %v102 = vmul.f32 -0.5, %v98
    %v103 = vadd.f32 %v102, 1.0
    %v104 = vmul.f32 %v103, %v98
    %v105 = vand.u32 2147483647, %v98
    %vm106 = vcmp.lt.f32.partialorder %v105, 0.0004427343
    %v107 = vsel %vm106, %v104, %v101
    %v108 = vmul.f32 %v107, 0.01
    %v109 = vsub.f32 %v92, %v108
    %v110 = vsub.f32 %v109, %v91
    %v111 = vsub.f32 %v110, 0.011544313
    %vm112 = vcmp.gt.f32.partialorder %v111, 20.0
    %v113 = vmin.f32 %v111, 20.0
    %v114 = vmul.f32 %v113, 1.442695
    %v115 = vpow.pop %v114
    %v116 = vadd.f32 %v115, 1.0
    %v117 = vlog2.pop %v116
    %v118 = vmul.f32 %v117, 0.6931472
    %v119 = vmul.f32 -0.5, %v115
    %v120 = vadd.f32 %v119, 1.0
    %v121 = vmul.f32 %v120, %v115
    %v122 = vand.u32 2147483647, %v115
    %vm123 = vcmp.lt.f32.partialorder %v122, 0.0004427343
    %v124 = vsel %vm123, %v121, %v118
    %v125 = vsel %vm112, %v111, %v124
    %v126 = vmax.f32 %v125, 1.1754944e-38
    %v127 = vlog2.pop %v126
    %v128 = vmul.f32 %v127, 0.6931472
    %vm129 = vcmask 261120
    %v130 = vsel %vm129, %v128, 0.0
    %131 = vadd.xlane.f32.xlu0 %v130
    %v132 = vpop.xlane.xlu0 %131
    %v133 = vsub.f32 %v71, 0.011544313
    %vm134 = vcmp.gt.f32.partialorder %v133, 20.0
    %v135 = vmin.f32 %v133, 20.0
    %v136 = vmul.f32 %v135, 1.442695
    %v137 = vpow.pop %v136
    %v138 = vadd.f32 %v137, 1.0
    %v139 = vlog2.pop %v138
    %v140 = vmul.f32 %v139, 0.6931472
    %v141 = vmul.f32 -0.5, %v137
    %v142 = vadd.f32 %v141, 1.0
    %v143 = vmul.f32 %v142, %v137
    %v144 = vand.u32 2147483647, %v137
    %vm145 = vcmp.lt.f32.partialorder %v144, 0.0004427343
    %v146 = vsel %vm145, %v143, %v140
    %v147 = vsel %vm134, %v133, %v146
    %v148 = vmax.f32 %v147, 1.1754944e-38
    %v149 = vlog2.pop %v148
    %v150 = vmul.f32 %v149, 0.6931472
    %v151 = vsel %vm129, %v150, 0.0
    %152 = vadd.xlane.f32.xlu0 %v151
    %v153 = vpop.xlane.xlu0 %152
    %v154 = vrcp.pop %v153
    %v155 = vmul.f32 %v132, %v154
    %vm156 = vcmask 7168
    %157 = vst.msk [vmem:[%s4] sm:$0xff] %vm156, %v155
    // Predicated region
    $region34: #{tpu_custom_call.1} parent=1 // pred_check
      _
    $region35: #{tpu_custom_call.1} parent=1 // pred_check_branch
      %159 = sbr.rel (0) target = $region37
    $region36: #{tpu_custom_call.1} parent=1 // pred_region
      _
    $region37: #{tpu_custom_call.1} parent=1 // pred_fallthru
      _
    // Predicated region
    $region38: #{tpu_custom_call.1} parent=1 // pred_check
      _
    $region39: #{tpu_custom_call.1} parent=1 // pred_check_branch
      %161 = sbr.rel (0) target = $region41
    $region40: #{tpu_custom_call.1} parent=1 // pred_region
      _
    $region41: #{tpu_custom_call.1} parent=1 // pred_fallthru
      _
    %162 = vsyncpa [#allocation3], 1
    %163 = vsyncpa [#allocation5], 1
    %164 = vsyncpa [#allocation8], 1

</llo_original>
